<compile_context>
chip_gen: v5e
topology: v5e:2x2
jax: 0.10.0
libtpu: 0.0.40
codegen_flags: <defaults>
</compile_context>

<pallas_src>
import jax
import jax.numpy as jnp
from jax.experimental import pallas as pl
from jax.experimental.pallas import tpu as pltpu

EPS = 1e-6

_SMEM_SPEC = pl.BlockSpec(memory_space=pltpu.MemorySpace.SMEM)


# --------------------------- VMEM budget helpers ---------------------------- #

def _vmem_capacity_bytes():
    """Per-core VMEM capacity; conservative v7x value if the query fails."""
    try:
        info = pltpu.get_tpu_info()
        cap = int(getattr(info, "vmem_capacity_bytes", 0))
        if cap > 0:
            return cap
    except Exception:
        pass
    return 64 << 20          # v7x per-TensorCore VMEM (v5e/v6e have 128 MiB)


_VMEM_CAP = _vmem_capacity_bytes()
_BLOCK_BUDGET_BYTES = int(0.70 * _VMEM_CAP)   # block buffers + scratch
_VMEM_LIMIT_CAP = int(0.90 * _VMEM_CAP)


def _vmem_limit(need_bytes):
    limit = max(32 << 20, int(need_bytes) + (4 << 20))
    assert limit <= _VMEM_LIMIT_CAP, (
        f"kernel VMEM need {need_bytes}B exceeds limit cap {_VMEM_LIMIT_CAP}B")
    return limit


# ----------------------------- tiling helpers ------------------------------- #

def _round_rows(tile, n, multiple=8):
    """Round a row tile to the sublane multiple; prefer >=2 (and an even
    number of) row blocks so v7x's two TensorCores share the parallel axis."""
    tile = int(min(tile, n))
    if tile >= n:
        if n >= 2 * multiple:
            tile = -(-n // 2)                 # at least two blocks
        else:
            return n                          # full-extent block (always legal)
    tile = max(multiple, (tile // multiple) * multiple)
    if tile >= n:
        return n
    t = tile
    for _ in range(4):                        # best-effort even block count
        if t < multiple:
            break
        if (-(-n // t)) % 2 == 0:
            return t
        t -= multiple
    return tile


def _choose_tile_rows(n, per_row_bytes, fixed_bytes=0, multiple=8):
    """Largest row tile whose total footprint fits the block budget.

    per_row_bytes: VMEM bytes per row summed over all row-tiled buffers
                   (already including double-buffering factors).
    fixed_bytes:   footprint of row-independent buffers (weight tile, bias).
    """
    per_row = max(1, int(per_row_bytes))
    avail = max(_BLOCK_BUDGET_BYTES - fixed_bytes, 2 * multiple * per_row)
    return _round_rows(avail // per_row, n, multiple=multiple)


def _fused_row_multiple(n, itemsize):
    """MXU-shaped M tiles: 256 (v6e/v7x MXU) when enough rows, else 128 (v5e),
    else the sublane multiple (16 for packed dtypes)."""
    if n >= 512:
        return 256
    if n >= 256:
        return 128
    return 16 if itemsize < 4 else 8


def _pick_col_tile(extent):
    """Largest multiple-of-128 tile <= 512 that divides `extent`; fall back to
    the full extent (always a legal block)."""
    for t in (512, 256, 128):
        if extent % t == 0:
            return t
    return extent


# -------------------------------- kernels ----------------------------------- #

def _layernorm_kernel(alpha_ref, bias_ref, x_ref, o_ref):
    """Row-wise LayerNormalization (torch-style unbiased std, scalar params)."""
    x = x_ref[...].astype(jnp.float32)                        # (tile_n, d)
    d = x.shape[-1]
    mean = jnp.mean(x, axis=-1, keepdims=True)
    centered = x - mean
    var = jnp.sum(centered * centered, axis=-1, keepdims=True) / (d - 1)
    std = jnp.sqrt(var)
    # Fold alpha into a per-row scale so the reciprocal only touches the
    # (tile_n, 1) column; exact reciprocal keeps the 1e-5-level tolerance.
    scale = alpha_ref[0] * pl.reciprocal(std + EPS, approx=False)
    o_ref[...] = (centered * scale + bias_ref[0]).astype(o_ref.dtype)


def _fused_ln_linear_residual_kernel(alpha_ref, bias_ref, x_ref, w_ref,
                                     blin_ref, o_ref,
                                     mean_ref, scale_ref, acc_ref):
    """out = x + (LayerNorm(x) @ W + b_lin), tiled over (rows, out-cols, K).

    LN stats are computed once per row tile at k == 0 into VMEM scratch; the
    matmul accumulates in f32 scratch; the residual add is the epilogue at the
    last K step.  dropout: identity at inference.
    """
    j = pl.program_id(1)
    k = pl.program_id(2)
    tile_k = w_ref.shape[0]
    tile_e = o_ref.shape[1]

    @pl.when(k == 0)
    def _():
        x = x_ref[...].astype(jnp.float32)                    # (tile_n, d)
        d = x.shape[-1]
        mean = jnp.mean(x, axis=-1, keepdims=True)
        centered = x - mean
        var = jnp.sum(centered * centered, axis=-1, keepdims=True) / (d - 1)
        mean_ref[...] = mean
        scale_ref[...] = alpha_ref[0] * pl.reciprocal(jnp.sqrt(var) + EPS,
                                                      approx=False)
        acc_ref[...] = jnp.zeros_like(acc_ref)

    k_off = pl.multiple_of(k * tile_k, tile_k)
    xk = x_ref[:, pl.ds(k_off, tile_k)].astype(jnp.float32)   # (tile_n, tile_k)
    normed = (xk - mean_ref[...]) * scale_ref[...] + bias_ref[0]
    # bf16 MXU operands, f32 accumulation.
    acc_ref[...] += jnp.dot(normed.astype(w_ref.dtype), w_ref[...],
                            preferred_element_type=jnp.float32)

    @pl.when(k == pl.num_programs(2) - 1)
    def _():
        e_off = pl.multiple_of(j * tile_e, tile_e)
        x_res = x_ref[:, pl.ds(e_off, tile_e)].astype(jnp.float32)
        h = acc_ref[...] + blin_ref[...].astype(jnp.float32)
        o_ref[...] = (x_res + h).astype(o_ref.dtype)          # dropout = id


# -------------------------------- wrappers ----------------------------------- #

def layer_norm_pallas(x2d, alpha, bias):
    n, d = x2d.shape
    itemsize = jnp.dtype(x2d.dtype).itemsize
    multiple = 16 if itemsize < 4 else 8
    per_row = 4 * d * itemsize                  # x + out blocks, double-buffered
    tile_n = _choose_tile_rows(n, per_row, multiple=multiple)
    need = tile_n * per_row
    return pl.pallas_call(
        _layernorm_kernel,
        out_shape=jax.ShapeDtypeStruct((n, d), x2d.dtype),
        grid=(pl.cdiv(n, tile_n),),
        in_specs=[_SMEM_SPEC, _SMEM_SPEC,
                  pl.BlockSpec((tile_n, d), lambda i: (i, 0))],
        out_specs=pl.BlockSpec((tile_n, d), lambda i: (i, 0)),
        compiler_params=pltpu.CompilerParams(
            dimension_semantics=("parallel",),
            vmem_limit_bytes=_vmem_limit(need)),
    )(alpha, bias, x2d)


def residual_connection(x, sublayer, alpha, bias, dropout_rate=0.1,
                        training=False):
    """ResidualConnection.forward(x, sublayer) for an arbitrary sublayer
    callable (eval mode).

    The residual add is intentionally plain JAX: a standalone Pallas add would
    force sub_out through an extra HBM round trip; letting XLA fuse it into
    the sublayer epilogue removes that traffic.
    TODO(synk): training-mode dropout not implemented (eval / inference only).
    """
    b, s, d = x.shape
    x2d = x.reshape(b * s, d)
    normed = layer_norm_pallas(x2d, alpha, bias).reshape(b, s, d)
    sub_out = sublayer(normed)[0]               # sublayer returns a tuple
    return x + sub_out


def fused_ln_linear_residual(x, W, b_lin, alpha, bias, *,
                             tile_n=None, tile_e=None, tile_k=None):
    """Fully fused path for matmul-style sublayers:
         out = x + (LayerNorm(x) @ W + b_lin)
    LN is the matmul prologue and the residual add its epilogue, so `normed`
    never touches HBM.  W is tiled over output columns and K, so arbitrarily
    large d_model fits VMEM; W rides the MXU in bf16 with f32 accumulation.
    """
    b, s, d = x.shape
    assert W.shape[0] == d
    e = W.shape[1]
    assert e == d, "residual connection requires sublayer out dim == d_model"
    n = b * s
    x2d = x.reshape(n, d)

    # bf16 MXU operands: native throughput on v5e/v6e/v7x, half the W bytes.
    w_bf16 = W.astype(jnp.bfloat16)
    blin2d = b_lin.reshape(1, e).astype(jnp.float32)

    if tile_e is None:
        tile_e = _pick_col_tile(e)
    if tile_k is None:
        tile_k = _pick_col_tile(d)
    assert e % tile_e == 0 and d % tile_k == 0

    itemsize = jnp.dtype(x2d.dtype).itemsize
    # Per-row VMEM bytes: x block (full d) + out block, double-buffered, plus
    # the f32 accumulator and lane-padded LN-stats scratch.
    per_row = (2 * d * itemsize + 2 * tile_e * itemsize
               + tile_e * 4 + 2 * 128 * 4)
    # Row-independent blocks: W tile (bf16) + b_lin tile, double-buffered.
    fixed = 2 * (tile_k * tile_e * 2) + 2 * (tile_e * 4)
    if tile_n is None:
        tile_n = _choose_tile_rows(n, per_row, fixed_bytes=fixed,
                                   multiple=_fused_row_multiple(n, itemsize))
    need = tile_n * per_row + fixed

    grid = (pl.cdiv(n, tile_n), e // tile_e, d // tile_k)
    out2d = pl.pallas_call(
        _fused_ln_linear_residual_kernel,
        out_shape=jax.ShapeDtypeStruct((n, e), x2d.dtype),
        grid=grid,
        in_specs=[_SMEM_SPEC, _SMEM_SPEC,
                  pl.BlockSpec((tile_n, d), lambda i, j, k: (i, 0)),
                  pl.BlockSpec((tile_k, tile_e), lambda i, j, k: (k, j)),
                  pl.BlockSpec((1, tile_e), lambda i, j, k: (0, j))],
        out_specs=pl.BlockSpec((tile_n, tile_e), lambda i, j, k: (i, j)),
        scratch_shapes=[pltpu.VMEM((tile_n, 1), jnp.float32),   # mean
                        pltpu.VMEM((tile_n, 1), jnp.float32),   # alpha/ (std+eps)
                        pltpu.VMEM((tile_n, tile_e), jnp.float32)],  # acc
        compiler_params=pltpu.CompilerParams(
            dimension_semantics=("parallel", "parallel", "arbitrary"),
            vmem_limit_bytes=_vmem_limit(need)),
    )(alpha, bias, x2d, w_bf16, blin2d)
    return out2d.reshape(b, s, e)


# -------------------------------- reference ---------------------------------- #

def _layer_norm_ref(x, alpha, bias):
    mean = jnp.mean(x, axis=-1, keepdims=True)
    var = jnp.sum((x - mean) ** 2, axis=-1, keepdims=True) / (x.shape[-1] - 1)
    return alpha[0] * (x - mean) / (jnp.sqrt(var) + EPS) + bias[0]


# ---------------------------------- main ------------------------------------- #

if __name__ == "__main__":
    key = jax.random.PRNGKey(0)
    k_x, k_w, k_b = jax.random.split(key, 3)

    # Small but lane-dense shapes: d_model is a multiple of 128 so stores are
    # full-width vst, and 256 lets the N/K-tiled fused path be exercised.
    batch, seq, d_model = 2, 16, 256
    x = jax.random.normal(k_x, (batch, seq, d_model), dtype=jnp.float32)

    # LayerNormalization parameters (scalar, deterministic init as in __init__).
    alpha = jnp.ones((1,), dtype=jnp.float32)
    bias = jnp.zeros((1,), dtype=jnp.float32)

    # Example sublayer: a linear layer returning a tuple, mirroring
    # attention-style sublayers that return (output, attn_weights).
    W = jax.random.normal(k_w, (d_model, d_model), dtype=jnp.float32) * 0.05
    b_lin = jax.random.normal(k_b, (d_model,), dtype=jnp.float32) * 0.05

    def sublayer(t):
        y = jnp.einsum("bsd,de->bse", t, W,
                       precision=jax.lax.Precision.HIGHEST)
        return (y + b_lin, None)

    # --- generic path: Pallas LN + arbitrary sublayer + XLA-fused residual ---
    @jax.jit
    def generic_path(x, alpha, bias):
        return residual_connection(x, sublayer, alpha, bias,
                                   dropout_rate=0.1, training=False)

    out_generic = jax.block_until_ready(generic_path(x, alpha, bias))

    # --- fused path, adaptive tiles (W fits: single K step) ------------------
    @jax.jit
    def fused_path(x, W, b_lin, alpha, bias):
        return fused_ln_linear_residual(x, W, b_lin, alpha, bias)

    out_fused = jax.block_until_ready(fused_path(x, W, b_lin, alpha, bias))

    # --- fused path, forced small tiles: exercises the N/K accumulator loop --
    @jax.jit
    def fused_path_tiled(x, W, b_lin, alpha, bias):
        return fused_ln_linear_residual(x, W, b_lin, alpha, bias,
                                        tile_n=16, tile_e=128, tile_k=128)

    out_fused_tiled = jax.block_until_ready(
        fused_path_tiled(x, W, b_lin, alpha, bias))

    # References.
    normed_ref = _layer_norm_ref(x, alpha, bias)
    ref_f32 = x + sublayer(normed_ref)[0]                 # HIGHEST f32 matmul
    h_bf16 = jnp.einsum("bsd,de->bse",
                        normed_ref.astype(jnp.bfloat16), W.astype(jnp.bfloat16),
                        preferred_element_type=jnp.float32)
    ref_bf16 = x + (h_bf16 + b_lin)                       # bf16-MXU matched ref

    assert out_generic.shape == (batch, seq, d_model)
    assert out_fused.shape == (batch, seq, d_model)
    assert out_fused_tiled.shape == (batch, seq, d_model)

    err_g = float(jnp.max(jnp.abs(out_generic - ref_f32)))
    assert err_g < 5e-5, f"generic path max abs err {err_g}"

    # Fused paths use bf16 MXU operands -> compare against the matched-precision
    # reference with a tight tolerance, plus a loose sanity bound vs full f32.
    err_f = float(jnp.max(jnp.abs(out_fused - ref_bf16)))
    err_ft = float(jnp.max(jnp.abs(out_fused_tiled - ref_bf16)))
    assert err_f < 2e-3, f"fused path max abs err vs bf16 ref {err_f}"
    assert err_ft < 2e-3, f"tiled fused path max abs err vs bf16 ref {err_ft}"

    err_f32 = float(jnp.max(jnp.abs(out_fused - ref_f32)))
    assert err_f32 < 5e-2, f"fused path max abs err vs f32 ref {err_f32}"

    print("KERNEL_OK")
</pallas_src>

<mosaic_0001>
module attributes {stable_mosaic.version = 11 : i64} {
  func.func @_layernorm_kernel(%arg0: i32, %arg1: memref<1xf32, #tpu.memory_space<smem>>, %arg2: memref<1xf32, #tpu.memory_space<smem>>, %arg3: memref<16x256xf32, #tpu.memory_space<vmem>>, %arg4: memref<16x256xf32, #tpu.memory_space<vmem>>) attributes {dimension_semantics = [#tpu.dimension_semantics<parallel>], iteration_bounds = array<i64: 2>, scalar_prefetch = 0 : i64, scratch_operands = 0 : i64, tpu.core_type = #tpu.core_type<tc>, window_params = [{transform_indices = @transform_0, window_bounds = array<i64: 1>}, {transform_indices = @transform_1, window_bounds = array<i64: 1>}, {transform_indices = @transform_2, window_bounds = array<i64: 16, 256>}, {transform_indices = @transform_3, window_bounds = array<i64: 16, 256>}]} {
    %c0 = arith.constant 0 : index
    %c0_0 = arith.constant 0 : index
    %0 = vector.load %arg3[%c0, %c0_0] : memref<16x256xf32, #tpu.memory_space<vmem>>, vector<16x256xf32>
    %cst = arith.constant dense<0.000000e+00> : vector<16xf32>
    %1 = vector.multi_reduction <add>, %0, %cst [1] : vector<16x256xf32> to vector<16xf32>
    %2 = vector.shape_cast %1 : vector<16xf32> to vector<16x1xf32>
    %cst_1 = arith.constant 2.560000e+02 : f32
    %3 = vector.broadcast %cst_1 : f32 to vector<16x1xf32>
    %4 = arith.divf %2, %3 : vector<16x1xf32>
    %5 = vector.broadcast %4 : vector<16x1xf32> to vector<16x256xf32>
    %6 = arith.subf %0, %5 : vector<16x256xf32>
    %7 = arith.mulf %6, %6 : vector<16x256xf32>
    %cst_2 = arith.constant dense<0.000000e+00> : vector<16xf32>
    %8 = vector.multi_reduction <add>, %7, %cst_2 [1] : vector<16x256xf32> to vector<16xf32>
    %9 = vector.shape_cast %8 : vector<16xf32> to vector<16x1xf32>
    %cst_3 = arith.constant 2.550000e+02 : f32
    %10 = vector.broadcast %cst_3 : f32 to vector<16x1xf32>
    %11 = arith.divf %9, %10 : vector<16x1xf32>
    %12 = math.sqrt %11 : vector<16x1xf32>
    %c0_4 = arith.constant 0 : index
    %13 = memref.load %arg1[%c0_4] : memref<1xf32, #tpu.memory_space<smem>>
    %cst_5 = arith.constant 9.99999997E-7 : f32
    %14 = vector.broadcast %cst_5 : f32 to vector<16x1xf32>
    %15 = arith.addf %12, %14 : vector<16x1xf32>
    %16 = tpu.reciprocal %15 : vector<16x1xf32> -> vector<16x1xf32>
    %17 = vector.broadcast %13 : f32 to vector<16x1xf32>
    %18 = arith.mulf %17, %16 : vector<16x1xf32>
    %19 = vector.broadcast %18 : vector<16x1xf32> to vector<16x256xf32>
    %20 = arith.mulf %6, %19 : vector<16x256xf32>
    %c0_6 = arith.constant 0 : index
    %21 = memref.load %arg2[%c0_6] : memref<1xf32, #tpu.memory_space<smem>>
    %22 = vector.broadcast %21 : f32 to vector<16x256xf32>
    %23 = arith.addf %20, %22 : vector<16x256xf32>
    %c0_7 = arith.constant 0 : index
    %c0_8 = arith.constant 0 : index
    %24 = vector.load %arg4[%c0_7, %c0_8] : memref<16x256xf32, #tpu.memory_space<vmem>>, vector<16x256xf32>
    tpu.vector_store %arg4[%c0_7, %c0_8], %23 {strides = array<i32>} : memref<16x256xf32, #tpu.memory_space<vmem>>, vector<16x256xf32>,
    return
  }
  func.func @transform_0(%arg0: i32) -> i32 {
    %c0_i32 = arith.constant 0 : i32
    %c0_i32_0 = arith.constant 0 : i32
    return %c0_i32 : i32
  }
  func.func @transform_1(%arg0: i32) -> i32 {
    %c0_i32 = arith.constant 0 : i32
    %c0_i32_0 = arith.constant 0 : i32
    return %c0_i32 : i32
  }
  func.func @transform_2(%arg0: i32) -> (i32, i32) {
    %c0_i32 = arith.constant 0 : i32
    %c0_i32_0 = arith.constant 0 : i32
    return %arg0, %c0_i32 : i32, i32
  }
  func.func @transform_3(%arg0: i32) -> (i32, i32) {
    %c0_i32 = arith.constant 0 : i32
    %c0_i32_0 = arith.constant 0 : i32
    return %arg0, %c0_i32 : i32, i32
  }
}

</mosaic_0001>

<llo_original>
// kernel: generic_path.1
$region0: #{generic_path.1}
  #allocation0 [shape = 'u32[]', space=smem, size = 0x4, offset = 0x4, fixed_abs, tag = 'smem constant byte address 0x4 - core index']
  #allocation1 [shape = 'u32[72,128]{1,0:T(1,128)}', space=vmem, size = 0x9000, scoped, tag = 'internal scratch']
  #allocation2 [shape = 'f32[1]{0:T(128)S(6)}', space=smem, size = 0x200, scoped, tag = 'scoped memory for generic_path.1']
  #allocation3 [shape = 'f32[1]{0:T(128)S(6)}', space=smem, size = 0x200, scoped, tag = 'scoped memory for generic_path.1']
  %s0 = inlined_call_operand.<no memory space> [shape: f32[1], index: 0, kind: input, shape index: {}]
  %s1 = inlined_call_operand.<no memory space> [shape: f32[1], index: 1, kind: input, shape index: {}]
  %s2 = inlined_call_operand.hbm [shape: f32[32,256], index: 2, kind: input, shape index: {}]
  %s3 = inlined_call_operand.vmem [shape: f32[32,256], index: 3, kind: output, shape index: {}]
  %s4 = sld [smem:[#allocation0]]
  $region49: #{generic_path.1} parent=0
    _
  %s6 = ssub.s32 1, %s4
  %s7 = scalar_select 0, %s6, %s4
  %8 = sst [smem:[#allocation2]] %s0
  %9 = sst [smem:[#allocation3]] %s1
  $region1: #{generic_path.1} parent=0
    #allocation4 [shape = 'u8[32768]{0}', space=vmem, size = 0x8000, scoped, tag = 'input window, operand 2']
    #allocation5 [shape = 's32[2]{0}', space=sflag, size = 0x8, scoped, tag = 'scoped memory for generic_path.1']
    %10 = vsyncpa [#allocation5], 0
    %s11 = scalar_lea.sflag [#allocation5], 1
    %12 = vsyncpa %s11, 0
    loop: start=0, step=1, limit=4
    $region2: #{generic_path.1} parent=1 // loop_pre_header
      _
    $region3: #{generic_path.1} parent=1 // loop_header
      %s14 = sphi 0, %s18
      %p15 = scmp.ge.s32.totalorder %s14, 4
      %s22 = sphi 0, %s22
      %s24 = sphi 0, %s22
      %s25 = sphi 0, %s24
      %s39 = sphi 0, %s25
      %s43 = sphi 0, %s43
      %s45 = sphi 0, %s43
      %s46 = sphi 0, %s45
      %s60 = sphi 0, %s46
      %s66 = sphi 0, %s68
      %s69 = sphi 0, %s66
      %s70 = sphi 0, %s69
      %s86 = sphi 0, %s70
      %s92 = sphi 0, %s94
      %s95 = sphi 0, %s92
      %s96 = sphi 0, %s95
      %s112 = sphi 0, %s96
    $region4: #{generic_path.1} parent=1 // loop_header_branch
      %17 = sbr.rel (%p15) target = $region8
    $region5: #{generic_path.1} parent=1 // loop_body
      %s19 = ssub.s32 %s14, 1
      %s20 = ssub.s32 %s14, 2
      %s21 = sadd.s32 %s14, 1
      %s23 = sadd.s32 %s22, 1
      %p26 = scmp.eq.s32.totalorder %s14, 1
      %p27 = scmp.ne.s32.totalorder %s22, %s24
      %p28 = scmp.eq.s32.totalorder %s14, 0
      %p29 = por %p27, %p28
      %p30 = scmp.ne.s32.totalorder %s22, %s24
      %p31 = scmp.eq.s32.totalorder %s19, 1
      %p32 = por %p30, %p31
      %p33 = scmp.ne.s32.totalorder %s24, %s25
      %p34 = scmp.eq.s32.totalorder %s19, 0
      %p35 = por %p33, %p34
      %p36 = scmp.ne.s32.totalorder %s24, %s25
      %p37 = scmp.eq.s32.totalorder %s20, 1
      %p38 = por %p36, %p37
      %p40 = scmp.ne.s32.totalorder %s25, %s39
      %p41 = scmp.eq.s32.totalorder %s20, 0
      %p42 = por %p40, %p41
      %s44 = sadd.s32 %s43, 1
      %p47 = scmp.eq.s32.totalorder %s14, 1
      %p48 = scmp.ne.s32.totalorder %s43, %s45
      %p49 = scmp.eq.s32.totalorder %s14, 0
      %p50 = por %p48, %p49
      %p51 = scmp.ne.s32.totalorder %s43, %s45
      %p52 = scmp.eq.s32.totalorder %s19, 1
      %p53 = por %p51, %p52
      %p54 = scmp.ne.s32.totalorder %s45, %s46
      %p55 = scmp.eq.s32.totalorder %s19, 0
      %p56 = por %p54, %p55
      %p57 = scmp.ne.s32.totalorder %s45, %s46
      %p58 = scmp.eq.s32.totalorder %s20, 1
      %p59 = por %p57, %p58
      %p61 = scmp.ne.s32.totalorder %s46, %s60
      %p62 = scmp.eq.s32.totalorder %s20, 0
      %p63 = por %p61, %p62
      %s64 = ssub.s32 %s14, %s21
      %p65 = scmp.eq.s32.totalorder %s64, 0
      %s67 = sadd.s32 %s66, 1
      %s68 = scalar_select %p65, %s66, %s67
      %p71 = pneg %p65
      %p72 = scmp.eq.s32.totalorder %s14, 1
      %p73 = por %p71, %p72
      %p74 = scmp.ne.s32.totalorder %s66, %s69
      %p75 = scmp.eq.s32.totalorder %s14, 0
      %p76 = por %p74, %p75
      %p77 = scmp.ne.s32.totalorder %s66, %s69
      %p78 = scmp.eq.s32.totalorder %s19, 1
      %p79 = por %p77, %p78
      %p80 = scmp.ne.s32.totalorder %s69, %s70
      %p81 = scmp.eq.s32.totalorder %s19, 0
      %p82 = por %p80, %p81
      %p83 = scmp.ne.s32.totalorder %s69, %s70
      %p84 = scmp.eq.s32.totalorder %s20, 1
      %p85 = por %p83, %p84
      %p87 = scmp.ne.s32.totalorder %s70, %s86
      %p88 = scmp.eq.s32.totalorder %s20, 0
      %p89 = por %p87, %p88
      %s90 = ssub.s32 %s14, %s21
      %p91 = scmp.eq.s32.totalorder %s90, 0
      %s93 = sadd.s32 %s92, 1
      %s94 = scalar_select %p91, %s92, %s93
      %p97 = pneg %p91
      %p98 = scmp.eq.s32.totalorder %s14, 1
      %p99 = por %p97, %p98
      %p100 = scmp.ne.s32.totalorder %s92, %s95
      %p101 = scmp.eq.s32.totalorder %s14, 0
      %p102 = por %p100, %p101
      %p103 = scmp.ne.s32.totalorder %s92, %s95
      %p104 = scmp.eq.s32.totalorder %s19, 1
      %p105 = por %p103, %p104
      %p106 = scmp.ne.s32.totalorder %s95, %s96
      %p107 = scmp.eq.s32.totalorder %s19, 0
      %p108 = por %p106, %p107
      %p109 = scmp.ne.s32.totalorder %s95, %s96
      %p110 = scmp.eq.s32.totalorder %s20, 1
      %p111 = por %p109, %p110
      %p113 = scmp.ne.s32.totalorder %s96, %s112
      %p114 = scmp.eq.s32.totalorder %s20, 0
      %p115 = por %p113, %p114
      %p116 = scmp.le.s32.totalorder 1, %s14
      %p117 = scmp.lt.s32.totalorder %s14, 3
      %p118 = pnand %p116, %p117
      %p119 = pneg %p118
      // Predicated region
      $region9: #{generic_path.1} parent=5 // pred_check
        _
      $region10: #{generic_path.1} parent=5 // pred_check_branch
        %121 = sbr.rel (%p118) target = $region12
      $region11: #{generic_path.1} parent=5 // pred_region
        %s122 = ssub.s32 %s14, 1
        // Predicated region
        $region13: #{generic_path.1} parent=11 // pred_check
          %p123 = pneg %p35
        $region14: #{generic_path.1} parent=11 // pred_check_branch
          %125 = sbr.rel (%p123) target = $region16
        $region15: #{generic_path.1} parent=11 // pred_region
          _
        $region16: #{generic_path.1} parent=11 // pred_fallthru
          _
        // Predicated region
        $region17: #{generic_path.1} parent=11 // pred_check
          %p126 = pneg %p56
        $region18: #{generic_path.1} parent=11 // pred_check_branch
          %128 = sbr.rel (%p126) target = $region20
        $region19: #{generic_path.1} parent=11 // pred_region
          _
        $region20: #{generic_path.1} parent=11 // pred_fallthru
          _
      $region12: #{generic_path.1} parent=5 // pred_fallthru
        _
      %p129 = scmp.lt.s32.totalorder %s14, 2
      // Predicated region
      $region21: #{generic_path.1} parent=5 // pred_check
        %p130 = pneg %p129
      $region22: #{generic_path.1} parent=5 // pred_check_branch
        %132 = sbr.rel (%p130) target = $region24
      $region23: #{generic_path.1} parent=5 // pred_region
        // Predicated region
        $region25: #{generic_path.1} parent=23 // pred_check
          %p133 = pneg %p76
        $region26: #{generic_path.1} parent=23 // pred_check_branch
          %135 = sbr.rel (%p133) target = $region28
        $region27: #{generic_path.1} parent=23 // pred_region
          %s136 = sand.u32 %s66, 1
          %s137 = scalar_lea.sflag [#allocation5], %s136
          %s138 = sand.u32 %s66, 1
          %s139 = smul.addr %s138, 32
          %s140 = scalar_lea.vmem [#allocation4], %s139
          %s141 = smul.u32 2, %s14
          %143 = vsyncadd %s137, 0
          %s144 = smul.addr %s141, 2
          %s145 = smul.addr %s144, 8
          %s146 = scalar_lea.hbm %s2, %s145
          %s147 = sshll.u32 %s146, 4
          %s148 = int_to_ptr.hbm [resolvable:$true] %s147
          %s149 = sshll.u32 %s140, 4
          %s150 = int_to_ptr.vmem [resolvable:$true] %s149
          %155 = dma.hbm_to_vmem [thread:$0]  %s148, 512, %s150, %s137, 256, 256, 16
        $region28: #{generic_path.1} parent=23 // pred_fallthru
          _
      $region24: #{generic_path.1} parent=5 // pred_fallthru
        _
      %p156 = scmp.le.s32.totalorder 1, %s14
      %p157 = scmp.lt.s32.totalorder %s14, 3
      %p158 = pnand %p156, %p157
      %p159 = pneg %p158
      // Predicated region
      $region29: #{generic_path.1} parent=5 // pred_check
        _
      $region30: #{generic_path.1} parent=5 // pred_check_branch
        %161 = sbr.rel (%p158) target = $region32
      $region31: #{generic_path.1} parent=5 // pred_region
        %s162 = ssub.s32 %s14, 1
        %s163 = sand.u32 %s69, 1
        %s164 = scalar_lea.sflag [#allocation5], %s163
        %s165 = sand.u32 %s69, 1
        %s166 = smul.addr %s165, 32
        %s167 = scalar_lea.vmem [#allocation4], %s166
        // Predicated region
        $region33: #{generic_path.1} parent=31 // pred_check
          %p168 = pneg %p82
        $region34: #{generic_path.1} parent=31 // pred_check_branch
          %170 = sbr.rel (%p168) target = $region36
        $region35: #{generic_path.1} parent=31 // pred_region
          %172 = dma.done %s164, 512
        $region36: #{generic_path.1} parent=31 // pred_fallthru
          _
        %p173 = pneg %p35
        %p174 = pneg %p32
        %p175 = pneg %p56
        %p176 = pneg %p53
        %s177 = sand.u32 %s69, 1
        %s178 = scalar_lea.sflag [#allocation5], %s177
        %s179 = sand.u32 %s69, 1
        %s180 = smul.addr %s179, 32
        %s181 = scalar_lea.vmem [#allocation4], %s180
        %p182 = pneg %p82
        %p183 = pneg %p79
        %p184 = pneg %p108
        %p185 = pneg %p105
        %s186 = smul.u32 2, %s19
        %p187 = scmp.lt.s32.totalorder %s186, 3
        %s188 = scalar_select %p187, %s186, 3
        %s189 = smul.addr %s188, 2
        %s190 = smul.addr %s189, 8
        %s191 = scalar_lea.vmem %s3, %s190
        %s192 = smul.u32 2, %s19
        %s193 = smul.u32 2, %s19
        %p194 = scmp.lt.s32.totalorder %s193, 3
        %s195 = scalar_select %p194, %s193, 3
        %s196 = smul.addr %s195, 2
        %s197 = smul.addr %s196, 8
        %s198 = scalar_lea.vmem %s3, %s197
        %s199 = smul.u32 2, %s19
        %v200 = vld [vmem:[%s167] sm:$0xff]
        %v201 = vld [vmem:[%s167 + $0x8] sm:$0xff]
        %v202 = vld [vmem:[%s167 + $0x10] sm:$0xff]
        %v203 = vld [vmem:[%s167 + $0x18] sm:$0xff]
        %v204 = vadd.f32 %v200, %v201
        %205 = vadd.xlane.f32.xlu0 %v204
        %v206 = vpop.xlane.xlu0 %205
        %v207 = vadd.f32 %v202, %v203
        %208 = vadd.xlane.f32.xlu0 %v207
        %v209 = vpop.xlane.xlu0 %208
        %v210 = vrcp.pop 256.0
        %v211 = vmul.f32 256.0, %v210
        %v212 = vsub.f32 1.0, %v211
        %v213 = vmul.f32 %v210, %v212
        %v214 = vadd.f32 %v210, %v213
        %vm215 = vweird.f32 %v210
        %v216 = vsel %vm215, %v210, %v214
        %v217 = vmul.f32 %v206, %v216
        %v218 = vmul.f32 %v209, %v216
        %v219 = vsub.f32 %v200, %v217
        %v220 = vsub.f32 %v201, %v217
        %v221 = vsub.f32 %v202, %v218
        %v222 = vsub.f32 %v203, %v218
        %v223 = vmul.f32 %v219, %v219
        %v224 = vmul.f32 %v220, %v220
        %v225 = vmul.f32 %v221, %v221
        %v226 = vmul.f32 %v222, %v222
        %v227 = vadd.f32 %v223, %v224
        %228 = vadd.xlane.f32.xlu0 %v227
        %v229 = vpop.xlane.xlu0 %228
        %v230 = vadd.f32 %v225, %v226
        %231 = vadd.xlane.f32.xlu0 %v230
        %v232 = vpop.xlane.xlu0 %231
        %v233 = vrcp.pop 255.0
        %v234 = vmul.f32 255.0, %v233
        %v235 = vsub.f32 1.0, %v234
        %v236 = vmul.f32 %v233, %v235
        %v237 = vadd.f32 %v233, %v236
        %vm238 = vweird.f32 %v233
        %v239 = vsel %vm238, %v233, %v237
        %v240 = vmul.f32 %v229, %v239
        %v241 = vmul.f32 %v232, %v239
        %v242 = vrsqrt.pop %v240
        %v243 = vmul.f32 %v242, %v240
        %v244 = vmul.f32 %v243, %v242
        %v245 = vmul.f32 0.5, %v244
        %v246 = vsub.f32 1.5, %v245
        %v247 = vmul.f32 %v242, %v246
        %v248 = vmul.f32 %v240, %v247
        %vm249 = vcmp.eq.f32.partialorder %v240, inf
        %v250 = vsel %vm249, %v240, %v248
        %vm251 = vcmp.eq.f32.partialorder %v240, 0.0
        %v252 = vand.u32 %v240, 2147483648
        %v253 = vsel %vm251, %v252, %v250
        %v254 = vrsqrt.pop %v241
        %v255 = vmul.f32 %v254, %v241
        %v256 = vmul.f32 %v255, %v254
        %v257 = vmul.f32 0.5, %v256
        %v258 = vsub.f32 1.5, %v257
        %v259 = vmul.f32 %v254, %v258
        %v260 = vmul.f32 %v241, %v259
        %vm261 = vcmp.eq.f32.partialorder %v241, inf
        %v262 = vsel %vm261, %v241, %v260
        %vm263 = vcmp.eq.f32.partialorder %v241, 0.0
        %v264 = vand.u32 %v241, 2147483648
        %v265 = vsel %vm263, %v264, %v262
        %s266 = sld [smem:[#allocation2]]
        %v267 = vadd.f32 %v253, 1e-06
        %v268 = vadd.f32 %v265, 1e-06
        %v269 = vrcp.pop %v267
        %v270 = vmul.f32 %v267, %v269
        %v271 = vsub.f32 1.0, %v270
        %v272 = vmul.f32 %v269, %v271
        %v273 = vadd.f32 %v269, %v272
        %vm274 = vweird.f32 %v267
        %vm275 = vweird.f32 %v269
        %vm276 = vmor %vm274, %vm275
        %v277 = vsel %vm276, %v269, %v273
        %v278 = vand.u32 2147483647, %v267
        %vm279 = vcmp.eq.f32.partialorder %v278, 8.507059e+37
        %v280 = vand.u32 %v267, 2147483648
        %v281 = vor.u32 1.1754944e-38, %v280
        %v282 = vsel %vm279, %v281, %v277
        %v283 = vrcp.pop %v268
        %v284 = vmul.f32 %v268, %v283
        %v285 = vsub.f32 1.0, %v284
        %v286 = vmul.f32 %v283, %v285
        %v287 = vadd.f32 %v283, %v286
        %vm288 = vweird.f32 %v268
        %vm289 = vweird.f32 %v283
        %vm290 = vmor %vm288, %vm289
        %v291 = vsel %vm290, %v283, %v287
        %v292 = vand.u32 2147483647, %v268
        %vm293 = vcmp.eq.f32.partialorder %v292, 8.507059e+37
        %v294 = vand.u32 %v268, 2147483648
        %v295 = vor.u32 1.1754944e-38, %v294
        %v296 = vsel %vm293, %v295, %v291
        %v297 = vstv %s266
        %v298 = vmul.f32 %v297, %v282
        %v299 = vmul.f32 %v297, %v296
        %v300 = vmul.f32 %v219, %v298
        %v301 = vmul.f32 %v220, %v298
        %v302 = vmul.f32 %v221, %v299
        %v303 = vmul.f32 %v222, %v299
        %s304 = sld [smem:[#allocation3]]
        %v305 = vstv %s304
        %v306 = vadd.f32 %v300, %v305
        %v307 = vadd.f32 %v301, %v305
        %v308 = vadd.f32 %v302, %v305
        %v309 = vadd.f32 %v303, %v305
        %310 = vst [vmem:[%s198] sm:$0xff] %v306
        %311 = vst [vmem:[%s198 + $0x8] sm:$0xff] %v307
        %312 = vst [vmem:[%s198 + $0x10] sm:$0xff] %v308
        %313 = vst [vmem:[%s198 + $0x18] sm:$0xff] %v309
        %s314 = smul.u32 2, %s19
        %p315 = scmp.lt.s32.totalorder %s314, 3
        %s316 = scalar_select %p315, %s314, 3
        %s317 = smul.addr %s316, 2
        %s318 = smul.addr %s317, 8
        %s319 = scalar_lea.vmem %s3, %s318
        // Predicated region
        $region37: #{generic_path.1} parent=31 // pred_check
          %p320 = pneg %p105
        $region38: #{generic_path.1} parent=31 // pred_check_branch
          %322 = sbr.rel (%p320) target = $region40
        $region39: #{generic_path.1} parent=31 // pred_region
          %s323 = smul.u32 2, %s19
        $region40: #{generic_path.1} parent=31 // pred_fallthru
          _
      $region32: #{generic_path.1} parent=5 // pred_fallthru
        _
      %p324 = scmp.le.s32.totalorder 2, %s14
      // Predicated region
      $region41: #{generic_path.1} parent=5 // pred_check
        %p325 = pneg %p324
      $region42: #{generic_path.1} parent=5 // pred_check_branch
        %327 = sbr.rel (%p325) target = $region44
      $region43: #{generic_path.1} parent=5 // pred_region
        %s328 = ssub.s32 %s14, 2
        // Predicated region
        $region45: #{generic_path.1} parent=43 // pred_check
          %p329 = pneg %p111
        $region46: #{generic_path.1} parent=43 // pred_check_branch
          %331 = sbr.rel (%p329) target = $region48
        $region47: #{generic_path.1} parent=43 // pred_region
          %s332 = smul.u32 2, %s20
          %p333 = scmp.lt.s32.totalorder %s332, 3
          %s334 = scalar_select %p333, %s332, 3
          %s335 = smul.addr %s334, 2
          %s336 = smul.addr %s335, 8
          %s337 = scalar_lea.vmem %s3, %s336
        $region48: #{generic_path.1} parent=43 // pred_fallthru
          _
      $region44: #{generic_path.1} parent=5 // pred_fallthru
        _
    $region6: #{generic_path.1} parent=1 // loop_footer
      %s18 = sadd.s32 1, %s14
    $region7: #{generic_path.1} parent=1 // loop_footer_branch
      %13 = sbr.rel target = $region3
    $region8: #{generic_path.1} parent=1 // loop_exit
      _
    %338 = vsyncpa [#allocation5], 1
    %s339 = scalar_lea.sflag [#allocation5], 1
    %340 = vsyncpa %s339, 1

</llo_original>
